<compile_context>
chip_gen: v7x
topology: tpu7x:2x2x1
jax: 0.10.0
libtpu: 0.0.40
codegen_flags: <defaults>
</compile_context>

<pallas_src>
import math

import numpy as np
import jax
import jax.numpy as jnp
from jax.experimental import pallas as pl
from jax.experimental.pallas import tpu as pltpu


def _make_kernel(g: int):
    """Kernel over one (rt, g) block of packed timesteps -> (rt, lane_w) block."""

    def kernel(t_ref, const_ref, out_ref):
        # t_ref:     (rt, g)         f32  -- g timesteps packed per output row
        # const_ref: (g + 2, lane_w) f32  -- rows 0..g-1: 0/1 lane-group selector
        #                                    row g: freqs, row g+1: phase (0 / pi/2)
        # out_ref:   (rt, lane_w)    out dtype
        tvals = t_ref[...]
        freq = const_ref[g:g + 1, :]        # (1, lane_w)
        phase = const_ref[g + 1:g + 2, :]   # (1, lane_w)
        if g > 1:
            # Broadcast timestep j of each packed row onto lane group j via a
            # single MXU matmul against the constant one-hot selector (exact:
            # weights are 0/1), keeping the VALU slot free for mul/add.
            sel = const_ref[0:g, :]         # (g, lane_w)
            t_wide = jnp.dot(tvals, sel, preferred_element_type=jnp.float32)
        else:
            t_wide = tvals                  # (rt, 1): plain lane broadcast below
        # cos(x) == sin(x + pi/2): one full-width sin, one dense store.
        out_ref[...] = jnp.sin(t_wide * freq + phase).astype(out_ref.dtype)

    return kernel


def sinusoidal_time_embedding(t: jax.Array, dim: int,
                              out_dtype=jnp.float32) -> jax.Array:
    """Pallas equivalent of SinusoidalTimeEmbedding(dim)(t).

    t: (B,) timesteps.  Returns (B, dim): out[:, :dim//2] = sin, out[:, dim//2:] = cos.
    out_dtype=jnp.bfloat16 halves HBM write traffic if the consumer tolerates it.
    """
    assert dim % 2 == 0 and dim >= 4, "dim must be even and >= 4"
    B = int(t.shape[0])
    half = dim // 2

    # ---- lane-dense packing geometry ---------------------------------------
    if dim >= 128:
        dim_p, g = dim, 1                      # already lane-dense
    else:
        dim_p = 1 << (dim - 1).bit_length()    # next pow2 (divides 128)
        g = 128 // dim_p                       # timesteps packed per output row
    lane_w = g * dim_p
    rows = pl.cdiv(B, g)
    B_pad = rows * g

    # ---- constant tables (trace-time numpy; DMA'd once, reused every step) --
    scale = math.log(10000.0) / (half - 1)
    freqs = np.exp(-scale * np.arange(half, dtype=np.float64)).astype(np.float32)
    freq_row = np.zeros(dim_p, np.float32)
    freq_row[:half] = freqs
    freq_row[half:dim] = freqs                 # pad lanes stay 0 -> sin(0) = 0
    phase_row = np.zeros(dim_p, np.float32)
    phase_row[half:dim] = np.float32(np.pi / 2)

    const = np.zeros((g + 2, lane_w), np.float32)
    for j in range(g):
        const[j, j * dim_p:(j + 1) * dim_p] = 1.0   # one-hot selector rows
    const[g, :] = np.tile(freq_row, g)
    const[g + 1, :] = np.tile(phase_row, g)
    const = jnp.asarray(const)

    tf = t.astype(jnp.float32).reshape(-1)
    if B_pad != B:
        tf = jnp.pad(tf, (0, B_pad - B))       # padded timesteps sliced away below
    t_pack = tf.reshape(rows, g)

    # ---- batch tiling --------------------------------------------------------
    out_itemsize = np.dtype(out_dtype).itemsize
    bytes_per_row = lane_w * out_itemsize + g * 4
    tile_cap = 12 * 1024 * 1024                # per output tile (double-buffered)
    rt = min(rows, max(8, tile_cap // bytes_per_row))
    total_out = rows * lane_w * out_itemsize
    if total_out > (1 << 20):                  # >=2 grid steps: feed both v7x TCs
        rt = min(rt, max(8, pl.cdiv(rows, 2)))
    if rt < rows:
        rt = max(8, (rt // 8) * 8)             # tiled blocks: sublane dim % 8 == 0
    grid = (pl.cdiv(rows, rt),)

    out_packed = pl.pallas_call(
        _make_kernel(g),
        out_shape=jax.ShapeDtypeStruct((rows, lane_w), out_dtype),
        grid=grid,
        in_specs=[
            pl.BlockSpec((rt, g), lambda i: (i, 0)),
            pl.BlockSpec((g + 2, lane_w), lambda i: (0, 0)),
        ],
        out_specs=pl.BlockSpec((rt, lane_w), lambda i: (i, 0)),
        compiler_params=pltpu.CompilerParams(
            dimension_semantics=("parallel",),
            vmem_limit_bytes=40 * 1024 * 1024),
        cost_estimate=pl.CostEstimate(
            flops=int(2 * rows * g * lane_w + 2 * rows * lane_w),
            transcendentals=int(rows * lane_w),
            bytes_accessed=int(4 * B_pad + out_itemsize * rows * lane_w
                               + 4 * (g + 2) * lane_w)),
    )(t_pack, const)

    # Packed slab is row-major identical to (B_pad, dim_p); undo the padding.
    out = out_packed.reshape(B_pad, dim_p)
    if B_pad != B or dim_p != dim:
        out = out[:B, :dim]
    return out


def _reference(t: jax.Array, dim: int) -> jax.Array:
    half = dim // 2
    scale = math.log(10000.0) / (half - 1)
    freqs = jnp.exp(jnp.arange(half, dtype=jnp.float32) * -scale)
    emb = t.astype(jnp.float32)[:, None] * freqs[None, :]
    return jnp.concatenate([jnp.sin(emb), jnp.cos(emb)], axis=-1)


if __name__ == "__main__":
    k1, k2, k3 = jax.random.split(jax.random.PRNGKey(0), 3)
    # Tolerance covers the f32 sin(x + pi/2) phase trick, range reduction and
    # the f64-vs-f32 frequency-table rounding for t up to 1e3.
    tol = dict(atol=1e-3, rtol=1e-3)

    # Case 1: small dim, B multiple of g -> packed path w/ MXU selector (g = 4).
    B1, dim1 = 8, 32
    t1 = jax.random.uniform(k1, (B1,), jnp.float32, minval=0.0, maxval=1000.0)
    out1 = jax.block_until_ready(sinusoidal_time_embedding(t1, dim1))
    assert out1.shape == (B1, dim1)
    assert jnp.allclose(out1, _reference(t1, dim1), **tol), "mismatch (packed path)"

    # Case 2: dim >= 128 -> already lane-dense (g = 1 path).
    B2, dim2 = 4, 256
    t2 = jax.random.uniform(k2, (B2,), jnp.float32, minval=0.0, maxval=1000.0)
    out2 = jax.block_until_ready(sinusoidal_time_embedding(t2, dim2))
    assert out2.shape == (B2, dim2)
    assert jnp.allclose(out2, _reference(t2, dim2), **tol), "mismatch (g=1 path)"

    # Case 3: awkward dim (48 -> padded to 64 lanes) and B not a multiple of g.
    B3, dim3 = 5, 48
    t3 = jax.random.uniform(k3, (B3,), jnp.float32, minval=0.0, maxval=1000.0)
    out3 = jax.block_until_ready(sinusoidal_time_embedding(t3, dim3))
    assert out3.shape == (B3, dim3)
    assert jnp.allclose(out3, _reference(t3, dim3), **tol), "mismatch (padded path)"

    print("KERNEL_OK")
</pallas_src>

<mosaic_0001>
module attributes {stable_mosaic.version = 11 : i64} {
  func.func @kernel(%arg0: i32, %arg1: memref<2x4xf32, #tpu.memory_space<vmem>>, %arg2: memref<6x128xf32, #tpu.memory_space<vmem>>, %arg3: memref<2x128xf32, #tpu.memory_space<vmem>>) attributes {dimension_semantics = [#tpu.dimension_semantics<parallel>], iteration_bounds = array<i64: 1>, scalar_prefetch = 0 : i64, scratch_operands = 0 : i64, tpu.core_type = #tpu.core_type<tc>, window_params = [{transform_indices = @transform_0, window_bounds = array<i64: 2, 4>}, {pipeline_mode = #tpu.pipeline_mode<synchronous>, transform_indices = @transform_1, window_bounds = array<i64: 6, 128>}, {transform_indices = @transform_2, window_bounds = array<i64: 2, 128>}]} {
    %c0 = arith.constant 0 : index
    %c0_0 = arith.constant 0 : index
    %0 = vector.load %arg1[%c0, %c0_0] : memref<2x4xf32, #tpu.memory_space<vmem>>, vector<2x4xf32>
    %c4 = arith.constant 4 : index
    %c0_1 = arith.constant 0 : index
    %1 = vector.load %arg2[%c4, %c0_1] : memref<6x128xf32, #tpu.memory_space<vmem>>, vector<1x128xf32>
    %c5 = arith.constant 5 : index
    %c0_2 = arith.constant 0 : index
    %2 = vector.load %arg2[%c5, %c0_2] : memref<6x128xf32, #tpu.memory_space<vmem>>, vector<1x128xf32>
    %c0_3 = arith.constant 0 : index
    %c0_4 = arith.constant 0 : index
    %3 = vector.load %arg2[%c0_3, %c0_4] : memref<6x128xf32, #tpu.memory_space<vmem>>, vector<4x128xf32>
    %cst = arith.constant dense<0.000000e+00> : vector<2x128xf32>
    %4 = tpu.matmul %0, %3, %cst {dimension_numbers = #tpu.dot_dimension_numbers<[1], [0], [0], [1], [0, 0, 1, 1], [], []>} : vector<2x4xf32>, vector<4x128xf32>, vector<2x128xf32> -> vector<2x128xf32>
    %5 = vector.broadcast %1 : vector<1x128xf32> to vector<2x128xf32>
    %6 = arith.mulf %4, %5 : vector<2x128xf32>
    %7 = vector.broadcast %2 : vector<1x128xf32> to vector<2x128xf32>
    %8 = arith.addf %6, %7 : vector<2x128xf32>
    %9 = math.sin %8 : vector<2x128xf32>
    %c0_5 = arith.constant 0 : index
    %c0_6 = arith.constant 0 : index
    %10 = vector.load %arg3[%c0_5, %c0_6] : memref<2x128xf32, #tpu.memory_space<vmem>>, vector<2x128xf32>
    tpu.vector_store %arg3[%c0_5, %c0_6], %9 {strides = array<i32>} : memref<2x128xf32, #tpu.memory_space<vmem>>, vector<2x128xf32>,
    return
  }
  func.func @transform_0(%arg0: i32) -> (i32, i32) {
    %c0_i32 = arith.constant 0 : i32
    %c0_i32_0 = arith.constant 0 : i32
    return %arg0, %c0_i32 : i32, i32
  }
  func.func @transform_1(%arg0: i32) -> (i32, i32) {
    %c0_i32 = arith.constant 0 : i32
    %c0_i32_0 = arith.constant 0 : i32
    %c0_i32_1 = arith.constant 0 : i32
    return %c0_i32, %c0_i32_0 : i32, i32
  }
  func.func @transform_2(%arg0: i32) -> (i32, i32) {
    %c0_i32 = arith.constant 0 : i32
    %c0_i32_0 = arith.constant 0 : i32
    return %arg0, %c0_i32 : i32, i32
  }
}

</mosaic_0001>

<llo_original>
// kernel: tpu_custom_call.1
$region0: #{tpu_custom_call.1}
  #allocation0 [shape = 'u32[]', space=smem, size = 0x4, offset = 0x4, fixed_abs, tag = 'smem constant byte address 0x4 - core index']
  #allocation1 [shape = 'u32[144,128]{1,0:T(1,128)}', space=vmem, size = 0x12000, scoped, tag = 'internal scratch']
  %s0 = inlined_call_operand.hbm [shape: f32[2,4], index: 0, kind: input, shape index: {}]
  %s1 = inlined_call_operand.hbm [shape: f32[6,128], index: 1, kind: input, shape index: {}]
  %s2 = inlined_call_operand.hbm [shape: f32[2,128], index: 2, kind: output, shape index: {}]
  %s3 = sld [smem:[#allocation0]]
  $region26: #{tpu_custom_call.1} parent=0
    _
  %s5 = ssub.s32 1, %s3
  %s6 = scalar_select 0, %s5, %s3
  $region1: #{tpu_custom_call.1} parent=0
    #allocation2 [shape = 'u8[1024]{0}', space=vmem, size = 0x400, scoped, tag = 'input window, operand 0, single buffered']
    #allocation3 [shape = 's32[1]{0}', space=sflag, size = 0x4, scoped, tag = 'scoped memory for tpu_custom_call.1']
    #allocation4 [shape = 's32[1]{0}', space=sflag, size = 0x4, scoped, tag = 'scoped memory for tpu_custom_call.1']
    #allocation5 [shape = 'u8[4096]{0}', space=vmem, size = 0x1000, scoped, tag = 'input window, operand 1, single buffered']
    #allocation6 [shape = 's32[1]{0}', space=sflag, size = 0x4, scoped, tag = 'scoped memory for tpu_custom_call.1']
    #allocation7 [shape = 'u8[1024]{0}', space=vmem, size = 0x400, scoped, tag = 'output window, operand 0, single buffered']
    %7 = vsyncpa [#allocation3], 0
    %8 = vsyncpa [#allocation6], 0
    %9 = vsyncpa [#allocation4], 0
    // Predicated region
    $region2: #{tpu_custom_call.1} parent=1 // pred_check
      _
    $region3: #{tpu_custom_call.1} parent=1 // pred_check_branch
      %11 = sbr.rel (0) target = $region5
    $region4: #{tpu_custom_call.1} parent=1 // pred_region
      %s13 = ssub.s32 32, 32
      %14 = vsyncadd [#allocation3], %s13
      %s16 = sshll.u32 [#allocation2], 4
      %s17 = int_to_ptr.vmem [resolvable:$true] %s16
      %19 = dma.hbm_to_vmem [thread:$0]  %s0, 32, %s17, [#allocation3]
    $region5: #{tpu_custom_call.1} parent=1 // pred_fallthru
      _
    // Predicated region
    $region6: #{tpu_custom_call.1} parent=1 // pred_check
      _
    $region7: #{tpu_custom_call.1} parent=1 // pred_check_branch
      %21 = sbr.rel (0) target = $region9
    $region8: #{tpu_custom_call.1} parent=1 // pred_region
      %s23 = ssub.s32 128, 128
      %24 = vsyncadd [#allocation6], %s23
      %s26 = sshll.u32 [#allocation5], 4
      %s27 = int_to_ptr.vmem [resolvable:$true] %s26
      %29 = dma.hbm_to_vmem [thread:$0]  %s1, 128, %s27, [#allocation6]
    $region9: #{tpu_custom_call.1} parent=1 // pred_fallthru
      _
    // Predicated region
    $region10: #{tpu_custom_call.1} parent=1 // pred_check
      _
    $region11: #{tpu_custom_call.1} parent=1 // pred_check_branch
      %31 = sbr.rel (0) target = $region13
    $region12: #{tpu_custom_call.1} parent=1 // pred_region
      %32 = dma.done [#allocation3], 32
    $region13: #{tpu_custom_call.1} parent=1 // pred_fallthru
      _
    // Predicated region
    $region14: #{tpu_custom_call.1} parent=1 // pred_check
      _
    $region15: #{tpu_custom_call.1} parent=1 // pred_check_branch
      %34 = sbr.rel (0) target = $region17
    $region16: #{tpu_custom_call.1} parent=1 // pred_region
      %35 = dma.done [#allocation6], 128
    $region17: #{tpu_custom_call.1} parent=1 // pred_fallthru
      _
    %v36 = vld [vmem:[#allocation2] sm:$0x3]
    %v37 = vld [vmem:[#allocation5 + $0x4] sm:$0x1]
    %v38 = vld [vmem:[#allocation5 + $0x5] sm:$0x1]
    %v39 = vld [vmem:[#allocation5] sm:$0xf]
    %vm40 = vcmask 31744
    %v42 = vsel %vm40, %v36, 0
    %vm44 = vcmask 1043456
    %v46 = vsel %vm44, %v39, 0
    %48 = vmatprep.subr.mxu0 0.0
    %49 = vmatpush1.msra.mxu0 %v46
    %50 = vmatprep.subr.mxu0 0.0
    %51 = vmatpush1.msra.mxu0 0.0
    %52 = vmatprep.subr.mxu0 0.0
    %53 = vmatpush1.msra.mxu0 0.0
    %54 = vmatprep.subr.mxu0 0.0
    %55 = vmatpush1.msra.mxu0 0.0
    %56 = vmatprep.subr.mxu0 0.0
    %57 = vmatpush1.msra.mxu0 0.0
    %58 = vmatprep.subr.mxu0 0.0
    %59 = vmatpush1.msra.mxu0 0.0
    %60 = vmatprep.subr.mxu0 0.0
    %61 = vmatpush1.msra.mxu0 0.0
    %62 = vmatprep.subr.mxu0 0.0
    %63 = vmatpush1.msra.mxu0 0.0
    %64 = vmatprep.subr.mxu0 0.0
    %65 = vmatpush1.msra.mxu0 0.0
    %66 = vmatprep.subr.mxu0 0.0
    %67 = vmatpush1.msra.mxu0 0.0
    %68 = vmatprep.subr.mxu0 0.0
    %69 = vmatpush1.msra.mxu0 0.0
    %70 = vmatprep.subr.mxu0 0.0
    %71 = vmatpush1.msra.mxu0 0.0
    %72 = vmatprep.subr.mxu0 0.0
    %73 = vmatpush1.msra.mxu0 0.0
    %74 = vmatprep.subr.mxu0 0.0
    %75 = vmatpush1.msra.mxu0 0.0
    %76 = vmatprep.subr.mxu0 0.0
    %77 = vmatpush1.msra.mxu0 0.0
    %78 = vmatprep.subr.mxu0 0.0
    %79 = vmatpush1.msra.mxu0 0.0
    %80 = vmatprep.subr.mxu0 0.0
    %81 = vmatpush1.msra.mxu0 0.0
    %82 = vmatprep.subr.mxu0 0.0
    %83 = vmatpush1.msra.mxu0 0.0
    %84 = vmatprep.subr.mxu0 0.0
    %85 = vmatpush1.msra.mxu0 0.0
    %86 = vmatprep.subr.mxu0 0.0
    %87 = vmatpush1.msra.mxu0 0.0
    %88 = vmatprep.subr.mxu0 0.0
    %89 = vmatpush1.msra.mxu0 0.0
    %90 = vmatprep.subr.mxu0 0.0
    %91 = vmatpush1.msra.mxu0 0.0
    %92 = vmatprep.subr.mxu0 0.0
    %93 = vmatpush1.msra.mxu0 0.0
    %94 = vmatprep.subr.mxu0 0.0
    %95 = vmatpush1.msra.mxu0 0.0
    %96 = vmatprep.subr.mxu0 0.0
    %97 = vmatpush1.msra.mxu0 0.0
    %98 = vmatprep.subr.mxu0 0.0
    %99 = vmatpush1.msra.mxu0 0.0
    %100 = vmatprep.subr.mxu0 0.0
    %101 = vmatpush1.msra.mxu0 0.0
    %102 = vmatprep.subr.mxu0 0.0
    %103 = vmatpush1.msra.mxu0 0.0
    %104 = vmatprep.subr.mxu0 0.0
    %105 = vmatpush1.msra.mxu0 0.0
    %106 = vmatprep.subr.mxu0 0.0
    %107 = vmatpush1.msra.mxu0 0.0
    %108 = vmatprep.subr.mxu0 0.0
    %109 = vmatpush1.msra.mxu0 0.0
    %110 = vmatprep.subr.mxu0 0.0
    %111 = vmatpush1.msra.mxu0 0.0
    %112 = vmatprep.mubr.f32.mxu0 0.0
    %113 = vmatmul.mubr.f32.gmra.mrb[0].mxu0 %v42
    %v114 = vpop.f32.mrb[0].mxu0
    %v115 = vadd.f32 0.0, %v114
    %v116 = vpop.f32.mrb[0].mxu0
    %117 = vdwg.mxu0
    %v118 = vlaneseq
    %v119 = vshrl.u32 %v118, 7
    %v120 = vsub.s32 0, %v119
    %v121 = vrot.slane %v37, %v120
    %v122 = vmul.f32 %v115, %v121
    %v123 = vlaneseq
    %v124 = vshrl.u32 %v123, 7
    %v125 = vsub.s32 0, %v124
    %v126 = vrot.slane %v38, %v125
    %v127 = vadd.f32 %v122, %v126
    %v128 = vand.u32 2147483647, %v127
    %vm129 = vcmp.le.f32.partialorder %v128, 0.7853982
    %vm130 = vcmp.lt.s32.totalorder %v127, 0
    %v131 = vand.u32 %v127, 2139095040
    %v132 = vshrl.u32 %v131, 23
    %v133 = vsub.s32 %v132, 127
    %v134 = vand.u32 2147483647, %v127
    %v135 = vand.u32 %v134, 8388607
    %v136 = vor.u32 %v135, 8388608
    %v137 = vsub.s32 0, %v136
    %v138 = vadd.s32 %v133, 1
    %vm139 = vcmp.gt.s32.totalorder %v138, 0
    %v140 = vsel %vm139, %v138, 0
    %v141 = vshrl.u32 %v140, 5
    %v142 = vand.u32 %v140, 31
    %v143 = vsub.s32 32, %v142
    %v144 = vshrl.u32 683565275, %v143
    %v145 = vshll.u32 683565275, %v142
    %v146 = vshrl.u32 2475754826, %v143
    %v147 = vor.u32 %v145, %v146
    %v148 = vshll.u32 2475754826, %v142
    %v149 = vshrl.u32 2131351028, %v143
    %v150 = vor.u32 %v148, %v149
    %v151 = vshll.u32 2131351028, %v142
    %v152 = vshrl.u32 2102212464, %v143
    %v153 = vor.u32 %v151, %v152
    %v154 = vshll.u32 2102212464, %v142
    %v155 = vshrl.u32 920167782, %v143
    %v156 = vor.u32 %v154, %v155
    %v157 = vshll.u32 920167782, %v142
    %v158 = vshrl.u32 1326507024, %v143
    %v159 = vor.u32 %v157, %v158
    %vm160 = vcmp.lt.s32.totalorder %v141, 1
    %vm161 = vcmp.lt.s32.totalorder %v141, 2
    %vm162 = vcmp.lt.s32.totalorder %v141, 3
    %vm163 = vcmp.lt.s32.totalorder %v141, 4
    %v164 = vsel %vm160, %v144, %v147
    %v165 = vsel %vm163, %v153, 2102212464
    %v166 = vsel %vm162, %v150, %v165
    %v167 = vsel %vm161, %v164, %v166
    %v168 = vsel %vm160, %v147, %v150
    %v169 = vsel %vm163, %v156, 920167782
    %v170 = vsel %vm162, %v153, %v169
    %v171 = vsel %vm161, %v168, %v170
    %v172 = vsel %vm160, %v150, %v153
    %v173 = vsel %vm163, %v159, 1326507024
    %v174 = vsel %vm162, %v156, %v173
    %v175 = vsel %vm161, %v172, %v174
    %v176 = vshll.u32 %v136, 8
    %v177 = vmul.u32.u64.compose %v176, %v175
    %v178 = vextract.low.u32 %v177
    %v179 = vextract.high.u32 %v177
    %v180 = vmul.u32.u64.compose %v176, %v171
    %v181 = vextract.low.u32 %v180
    %v182 = vextract.high.u32 %v180
    %v183 = vmul.u32 %v176, %v167
    %v184 = vadd.s32 %v179, %v181
    %vm185 = vc.u32 %v179, %v181
    %v186 = vadd.s32 %v182, 1
    %v187 = vsel %vm185, %v186, %v182
    %v188 = vadd.s32 %v183, %v187
    %v189 = vadd.s32 %v188, 536870912
    %v190 = vshrl.u32 %v189, 30
    %v191 = vshll.u32 %v190, 30
    %v192 = vsub.s32 %v188, %v191
    %vm193 = vcmp.lt.s32.totalorder %v192, 0
    %v194 = vsub.s32 0, %v192
    %v195 = vsel %vm193, %v194, %v192
    %v196 = vclz %v195
    %v197 = vsub.s32 %v196, 2
    %vm198 = vcmp.gt.s32.totalorder 0, %v197
    %v199 = vsel %vm198, 0, %v197
    %v200 = vsub.s32 32, %v199
    %v201 = vshll.u32 %v192, %v199
    %v202 = vshrl.u32 %v184, %v200
    %v203 = vor.u32 %v201, %v202
    %v204 = vsub.s32 4294967266, %v199
    %v205 = vadd.s32 %v204, 127
    %v206 = vshll.u32 %v205, 23
    %v207 = vor.u32 4788187, %v206
    %v208 = vand.u32 2147483647, %v207
    %v210 = vcvt.s32.f32 %v203
    %v211 = vmul.f32 %v210, %v208
    %v212 = vxor.u32 %v211, 2147483648
    %v213 = vsel %vm130, %v212, %v211
    %v214 = vsub.s32 4, %v190
    %v215 = vsel %vm130, %v214, %v190
    %v216 = vsel %vm129, %v127, %v213
    %v217 = vsel %vm129, 0, %v215
    %v218 = vcosq.f32.pop %v216
    %v219 = vsinq.f32.pop %v216
    %vm220 = vweird.f32 %v127
    %v221 = vadd.s32 %v217, 3
    %v222 = vand.u32 %v221, 3
    %vm223 = vcmp.lt.s32.totalorder %v222, 2
    %vm224 = vcmp.eq.s32.totalorder %v222, 0
    %v225 = vxor.u32 %v219, 2147483648
    %v226 = vsel %vm224, %v218, %v225
    %vm227 = vcmp.eq.s32.totalorder %v222, 2
    %v228 = vxor.u32 %v218, 2147483648
    %v229 = vsel %vm227, %v228, %v219
    %v230 = vsel %vm223, %v226, %v229
    %v231 = vsel %vm220, nan, %v230
    %232 = vst [vmem:[#allocation7] sm:$0x3] %v231
    // Predicated region
    $region18: #{tpu_custom_call.1} parent=1 // pred_check
      _
    $region19: #{tpu_custom_call.1} parent=1 // pred_check_branch
      %234 = sbr.rel (0) target = $region21
    $region20: #{tpu_custom_call.1} parent=1 // pred_region
      %s236 = ssub.s32 32, 32
      %237 = vsyncadd [#allocation4], %s236
      %s239 = sshll.u32 [#allocation7], 4
      %s240 = int_to_ptr.vmem [resolvable:$true] %s239
      %242 = dma.vmem_to_hbm [thread:$0]  %s240, 32, %s2, [#allocation4]
    $region21: #{tpu_custom_call.1} parent=1 // pred_fallthru
      _
    // Predicated region
    $region22: #{tpu_custom_call.1} parent=1 // pred_check
      _
    $region23: #{tpu_custom_call.1} parent=1 // pred_check_branch
      %244 = sbr.rel (0) target = $region25
    $region24: #{tpu_custom_call.1} parent=1 // pred_region
      %245 = dma.done [#allocation4], 32
    $region25: #{tpu_custom_call.1} parent=1 // pred_fallthru
      _
    %246 = vsyncpa [#allocation3], 1
    %247 = vsyncpa [#allocation6], 1
    %248 = vsyncpa [#allocation4], 1

</llo_original>
